<compile_context>
chip_gen: v7x
topology: tpu7x:2x2x1
jax: 0.10.0
libtpu: 0.0.40
codegen_flags: <defaults>
</compile_context>

<pallas_src>
import functools

import jax
import jax.numpy as jnp
from jax.experimental import pallas as pl
from jax.experimental.pallas import tpu as pltpu


_EPS = 1e-12                        # F.normalize default eps
_WEIGHT_RESIDENT_BYTES = 16 << 20   # keep the full weight resident below this
_VMEM_FLOOR = 32 << 20              # never request less than the usual default
_VMEM_CEIL = 64 << 20               # v7x physical VMEM per TensorCore


def _round_up(v, m):
    return (v + m - 1) // m * m


# ---------------------------------------------------------------------------
# Kernel 1: per-column inverse L2 norm of the weight (runs once, tiny).
# ---------------------------------------------------------------------------
def _col_inv_norm_kernel(w_ref, inv_ref):
    w = w_ref[...].astype(jnp.float32)                  # norm math in f32
    ss = jnp.sum(w * w, axis=0, keepdims=True)          # (1, tn)
    # 1 / max(||w||, eps)  ==  rsqrt(max(||w||^2, eps^2)); EUP op.
    inv_ref[...] = jax.lax.rsqrt(jnp.maximum(ss, _EPS * _EPS))


# ---------------------------------------------------------------------------
# Kernel 2: o = (x @ W) * inv_col_norm  (MXU matmul + folded output scale).
# ---------------------------------------------------------------------------
def _normlinear_kernel(x_ref, w_ref, inv_ref, o_ref):
    acc = jnp.dot(x_ref[...], w_ref[...],               # native dtype -> MXU
                  preferred_element_type=jnp.float32)   # f32 accumulation
    o_ref[...] = (acc * inv_ref[...]).astype(o_ref.dtype)


def _pick_tn(in_dim, out_dim, itemsize):
    """Full weight resident when it fits; otherwise tile out_dim (mult of 128)."""
    if in_dim * out_dim * itemsize <= _WEIGHT_RESIDENT_BYTES:
        return out_dim
    for cand in (512, 256, 128):
        if out_dim % cand == 0:
            return cand
    return out_dim   # odd out_dim: keep full width (lane-masked stores)


@functools.partial(jax.jit, static_argnames=("tm", "tn"))
def norm_linear(x, weight, *, tm=256, tn=None):
    """x: [..., in_dim], weight: [in_dim, out_dim] -> [..., out_dim].

    tm: row tile (128 fills the v5e MXU; 256-512 for v6e/v7x).
    tn: output-column tile; None = auto (full weight resident when it fits).
    """
    in_dim, out_dim = weight.shape
    orig_shape = x.shape
    x2 = x.reshape(-1, in_dim)
    m = x2.shape[0]

    # --- row tiling: shrink tm for small m, zero-pad m up to a tile multiple.
    tm_eff = min(tm, _round_up(m, 8))
    m_pad = _round_up(m, tm_eff)
    if m_pad != m:
        x2 = jnp.pad(x2, ((0, m_pad - m), (0, 0)))

    # --- column tiling of the weight / output.
    if tn is None:
        tn = _pick_tn(in_dim, out_dim, weight.dtype.itemsize)
    assert out_dim % tn == 0, "tn must divide out_dim"
    n_tiles = out_dim // tn
    m_tiles = m_pad // tm_eff
    w_tile_bytes = in_dim * tn * weight.dtype.itemsize

    # ---- pass 1: inverse column norms (one-time, hoisted out of the matmul).
    norm_vmem = 2 * w_tile_bytes + 3 * in_dim * tn * 4
    inv_norm = pl.pallas_call(
        _col_inv_norm_kernel,
        out_shape=jax.ShapeDtypeStruct((1, out_dim), jnp.float32),
        grid_spec=pltpu.PrefetchScalarGridSpec(
            num_scalar_prefetch=0,
            grid=(n_tiles,),
            in_specs=[pl.BlockSpec((in_dim, tn), lambda j: (0, j))],
            out_specs=pl.BlockSpec((1, tn), lambda j: (0, j)),
        ),
        compiler_params=pltpu.CompilerParams(
            dimension_semantics=("parallel",),
            vmem_limit_bytes=min(max(norm_vmem, _VMEM_FLOOR), _VMEM_CEIL)),
    )(weight)

    # ---- pass 2: tiled matmul with the column scale folded into the output.
    # Weight block is revisited (never re-fetched) across the inner row axis;
    # when large, hold a single copy instead of double-buffering (v7x 64 MiB).
    if w_tile_bytes >= (4 << 20):
        w_spec = pl.BlockSpec((in_dim, tn), lambda j, i: (0, j),
                              pipeline_mode=pl.Buffered(1))
        w_bufs = 1
    else:
        w_spec = pl.BlockSpec((in_dim, tn), lambda j, i: (0, j))
        w_bufs = 2

    vmem_need = (2 * tm_eff * in_dim * x2.dtype.itemsize     # x tiles (2x buf)
                 + w_bufs * w_tile_bytes                      # weight tile(s)
                 + 2 * tm_eff * tn * x.dtype.itemsize         # out tiles
                 + 2 * tn * 4)                                # inv-norm tiles
    vmem_limit = min(max(int(vmem_need * 1.5), _VMEM_FLOOR), _VMEM_CEIL)

    out2 = pl.pallas_call(
        _normlinear_kernel,
        out_shape=jax.ShapeDtypeStruct((m_pad, out_dim), x.dtype),
        grid_spec=pltpu.PrefetchScalarGridSpec(
            num_scalar_prefetch=0,
            grid=(n_tiles, m_tiles),      # N outer -> weight stays resident
            in_specs=[
                pl.BlockSpec((tm_eff, in_dim), lambda j, i: (i, 0)),  # x rows
                w_spec,                                               # weight
                pl.BlockSpec((1, tn), lambda j, i: (0, j)),           # inv norm
            ],
            out_specs=pl.BlockSpec((tm_eff, tn), lambda j, i: (i, j)),
        ),
        compiler_params=pltpu.CompilerParams(
            dimension_semantics=("parallel", "parallel"),
            vmem_limit_bytes=vmem_limit),
    )(x2, weight, inv_norm)

    if m_pad != m:
        out2 = out2[:m]
    return out2.reshape(*orig_shape[:-1], out_dim)


def xavier_uniform_relu(key, in_dim, out_dim, dtype=jnp.float32):
    # nn.init.xavier_uniform_(W, gain=calculate_gain('relu')) with W (in_dim, out_dim).
    gain = jnp.sqrt(2.0)
    bound = gain * jnp.sqrt(6.0 / (in_dim + out_dim))
    return jax.random.uniform(key, (in_dim, out_dim), dtype=dtype,
                              minval=-bound, maxval=bound)


if __name__ == "__main__":
    key = jax.random.PRNGKey(0)
    k_x, k_w = jax.random.split(key)

    # Small demo shapes; out_dim kept a multiple of 128 for lane-dense stores.
    batch, seq, in_dim, out_dim = 2, 8, 32, 128
    x = jax.random.normal(k_x, (batch, seq, in_dim), dtype=jnp.float32)
    weight = xavier_uniform_relu(k_w, in_dim, out_dim)

    out = jax.block_until_ready(norm_linear(x, weight))

    # Reference (same semantics as torch.matmul(x, F.normalize(W, dim=0))).
    w_n = weight / jnp.maximum(
        jnp.sqrt(jnp.sum(weight * weight, axis=0, keepdims=True)), 1e-12)
    ref = x @ w_n
    assert out.shape == (batch, seq, out_dim)
    assert jnp.allclose(out, ref, atol=3e-5, rtol=3e-5), \
        float(jnp.max(jnp.abs(out - ref)))

    # bf16 fast path: operands go to the MXU un-upcast, f32 accumulation.
    xb = x.astype(jnp.bfloat16)
    wb = weight.astype(jnp.bfloat16)
    out_b = jax.block_until_ready(norm_linear(xb, wb))
    wb32 = wb.astype(jnp.float32)
    ref_b = xb.astype(jnp.float32) @ (wb32 / jnp.maximum(
        jnp.sqrt(jnp.sum(wb32 * wb32, axis=0, keepdims=True)), 1e-12))
    assert out_b.shape == (batch, seq, out_dim)
    assert jnp.allclose(out_b.astype(jnp.float32), ref_b, atol=5e-2, rtol=5e-2)

    print("KERNEL_OK")
</pallas_src>

<mosaic_0001>
module attributes {stable_mosaic.version = 11 : i64} {
  func.func @_normlinear_kernel(%arg0: i32, %arg1: i32, %arg2: memref<16x32xf32, #tpu.memory_space<vmem>>, %arg3: memref<32x128xf32, #tpu.memory_space<vmem>>, %arg4: memref<1x128xf32, #tpu.memory_space<vmem>>, %arg5: memref<16x128xf32, #tpu.memory_space<vmem>>) attributes {dimension_semantics = [#tpu.dimension_semantics<parallel>, #tpu.dimension_semantics<parallel>], iteration_bounds = array<i64: 1, 1>, scalar_prefetch = 0 : i64, scratch_operands = 0 : i64, tpu.core_type = #tpu.core_type<tc>, window_params = [{transform_indices = @transform_0, window_bounds = array<i64: 16, 32>}, {transform_indices = @transform_1, window_bounds = array<i64: 32, 128>}, {transform_indices = @transform_2, window_bounds = array<i64: 1, 128>}, {transform_indices = @transform_3, window_bounds = array<i64: 16, 128>}]} {
    %c0 = arith.constant 0 : index
    %c0_0 = arith.constant 0 : index
    %0 = vector.load %arg2[%c0, %c0_0] : memref<16x32xf32, #tpu.memory_space<vmem>>, vector<16x32xf32>
    %c0_1 = arith.constant 0 : index
    %c0_2 = arith.constant 0 : index
    %1 = vector.load %arg3[%c0_1, %c0_2] : memref<32x128xf32, #tpu.memory_space<vmem>>, vector<32x128xf32>
    %cst = arith.constant dense<0.000000e+00> : vector<16x128xf32>
    %2 = tpu.matmul %0, %1, %cst {dimension_numbers = #tpu.dot_dimension_numbers<[1], [0], [0], [1], [0, 0, 1, 1], [], []>} : vector<16x32xf32>, vector<32x128xf32>, vector<16x128xf32> -> vector<16x128xf32>
    %c0_3 = arith.constant 0 : index
    %c0_4 = arith.constant 0 : index
    %3 = vector.load %arg4[%c0_3, %c0_4] : memref<1x128xf32, #tpu.memory_space<vmem>>, vector<1x128xf32>
    %4 = vector.broadcast %3 : vector<1x128xf32> to vector<16x128xf32>
    %5 = arith.mulf %2, %4 : vector<16x128xf32>
    %c0_5 = arith.constant 0 : index
    %c0_6 = arith.constant 0 : index
    %6 = vector.load %arg5[%c0_5, %c0_6] : memref<16x128xf32, #tpu.memory_space<vmem>>, vector<16x128xf32>
    tpu.vector_store %arg5[%c0_5, %c0_6], %5 {strides = array<i32>} : memref<16x128xf32, #tpu.memory_space<vmem>>, vector<16x128xf32>,
    return
  }
  func.func @transform_0(%arg0: i32, %arg1: i32) -> (i32, i32) {
    %c0_i32 = arith.constant 0 : i32
    %c0_i32_0 = arith.constant 0 : i32
    return %arg1, %c0_i32 : i32, i32
  }
  func.func @transform_1(%arg0: i32, %arg1: i32) -> (i32, i32) {
    %c0_i32 = arith.constant 0 : i32
    %c0_i32_0 = arith.constant 0 : i32
    return %c0_i32, %arg0 : i32, i32
  }
  func.func @transform_2(%arg0: i32, %arg1: i32) -> (i32, i32) {
    %c0_i32 = arith.constant 0 : i32
    %c0_i32_0 = arith.constant 0 : i32
    return %c0_i32, %arg0 : i32, i32
  }
  func.func @transform_3(%arg0: i32, %arg1: i32) -> (i32, i32) {
    %c0_i32 = arith.constant 0 : i32
    return %arg1, %arg0 : i32, i32
  }
}

module attributes {stable_mosaic.version = 11 : i64} {
  func.func @_col_inv_norm_kernel(%arg0: i32, %arg1: memref<32x128xf32, #tpu.memory_space<vmem>>, %arg2: memref<1x128xf32, #tpu.memory_space<vmem>>) attributes {dimension_semantics = [#tpu.dimension_semantics<parallel>], iteration_bounds = array<i64: 1>, scalar_prefetch = 0 : i64, scratch_operands = 0 : i64, tpu.core_type = #tpu.core_type<tc>, window_params = [{transform_indices = @transform_0, window_bounds = array<i64: 32, 128>}, {transform_indices = @transform_1, window_bounds = array<i64: 1, 128>}]} {
    %c0 = arith.constant 0 : index
    %c0_0 = arith.constant 0 : index
    %0 = vector.load %arg1[%c0, %c0_0] : memref<32x128xf32, #tpu.memory_space<vmem>>, vector<32x128xf32>
    %1 = arith.mulf %0, %0 : vector<32x128xf32>
    %cst = arith.constant dense<0.000000e+00> : vector<128xf32>
    %2 = vector.multi_reduction <add>, %1, %cst [0] : vector<32x128xf32> to vector<128xf32>
    %3 = vector.shape_cast %2 : vector<128xf32> to vector<1x128xf32>
    %cst_1 = arith.constant 1.000000e-24 : f32
    %4 = vector.broadcast %cst_1 : f32 to vector<1x128xf32>
    %5 = arith.maximumf %3, %4 : vector<1x128xf32>
    %6 = math.rsqrt %5 : vector<1x128xf32>
    %c0_2 = arith.constant 0 : index
    %c0_3 = arith.constant 0 : index
    %7 = vector.load %arg2[%c0_2, %c0_3] : memref<1x128xf32, #tpu.memory_space<vmem>>, vector<1x128xf32>
    tpu.vector_store %arg2[%c0_2, %c0_3], %6 {strides = array<i32>} : memref<1x128xf32, #tpu.memory_space<vmem>>, vector<1x128xf32>,
    return
  }
  func.func @transform_0(%arg0: i32) -> (i32, i32) {
    %c0_i32 = arith.constant 0 : i32
    %c0_i32_0 = arith.constant 0 : i32
    return %c0_i32, %arg0 : i32, i32
  }
  func.func @transform_1(%arg0: i32) -> (i32, i32) {
    %c0_i32 = arith.constant 0 : i32
    %c0_i32_0 = arith.constant 0 : i32
    return %c0_i32, %arg0 : i32, i32
  }
}

</mosaic_0001>

<llo_original>
// kernel: norm_linear.3
$region0: #{norm_linear.3}
  #allocation0 [shape = 'u32[]', space=smem, size = 0x4, offset = 0x4, fixed_abs, tag = 'smem constant byte address 0x4 - core index']
  #allocation1 [shape = 'u32[144,128]{1,0:T(1,128)}', space=vmem, size = 0x12000, scoped, tag = 'internal scratch']
  %s0 = inlined_call_operand.hbm [shape: f32[16,32], index: 0, kind: input, shape index: {}]
  %s1 = inlined_call_operand.vmem [shape: f32[32,128], index: 1, kind: input, shape index: {}]
  %s2 = inlined_call_operand.vmem [shape: f32[1,128], index: 2, kind: input, shape index: {}]
  %s3 = inlined_call_operand.hbm [shape: f32[16,128], index: 3, kind: output, shape index: {}]
  %s4 = sld [smem:[#allocation0]]
  $region26: #{norm_linear.3} parent=0
    _
  %s6 = ssub.s32 1, %s4
  %s7 = scalar_select 0, %s6, %s4
  $region1: #{norm_linear.3} parent=0
    #allocation2 [shape = 'u8[8192]{0}', space=vmem, size = 0x2000, scoped, tag = 'input window, operand 0, single buffered']
    #allocation3 [shape = 's32[1]{0}', space=sflag, size = 0x4, scoped, tag = 'scoped memory for norm_linear.3']
    #allocation4 [shape = 's32[1]{0}', space=sflag, size = 0x4, scoped, tag = 'scoped memory for norm_linear.3']
    #allocation5 [shape = 'u8[8192]{0}', space=vmem, size = 0x2000, scoped, tag = 'output window, operand 0, single buffered']
    %8 = vsyncpa [#allocation3], 0
    %9 = vsyncpa [#allocation4], 0
    // Predicated region
    $region2: #{norm_linear.3} parent=1 // pred_check
      _
    $region3: #{norm_linear.3} parent=1 // pred_check_branch
      %11 = sbr.rel (0) target = $region5
    $region4: #{norm_linear.3} parent=1 // pred_region
      %s13 = ssub.s32 256, 256
      %14 = vsyncadd [#allocation3], %s13
      %s15 = sshll.u32 [#allocation2], 4
      %s16 = int_to_ptr.vmem [resolvable:$true] %s15
      %21 = dma.hbm_to_vmem [thread:$0]  %s0, 256, %s16, [#allocation3], 128, 128, 8
    $region5: #{norm_linear.3} parent=1 // pred_fallthru
      _
    // Predicated region
    $region6: #{norm_linear.3} parent=1 // pred_check
      _
    $region7: #{norm_linear.3} parent=1 // pred_check_branch
      %23 = sbr.rel (0) target = $region9
    $region8: #{norm_linear.3} parent=1 // pred_region
      _
    $region9: #{norm_linear.3} parent=1 // pred_fallthru
      _
    // Predicated region
    $region10: #{norm_linear.3} parent=1 // pred_check
      _
    $region11: #{norm_linear.3} parent=1 // pred_check_branch
      %25 = sbr.rel (0) target = $region13
    $region12: #{norm_linear.3} parent=1 // pred_region
      _
    $region13: #{norm_linear.3} parent=1 // pred_fallthru
      _
    // Predicated region
    $region14: #{norm_linear.3} parent=1 // pred_check
      _
    $region15: #{norm_linear.3} parent=1 // pred_check_branch
      %27 = sbr.rel (0) target = $region17
    $region16: #{norm_linear.3} parent=1 // pred_region
      %28 = dma.done [#allocation3], 256
    $region17: #{norm_linear.3} parent=1 // pred_fallthru
      _
    %v29 = vld [vmem:[#allocation2] sm:$0xff]
    %v30 = vld [vmem:[#allocation2 + $0x8] sm:$0xff]
    %v31 = vld [vmem:[%s1] sm:$0xff]
    %v32 = vld [vmem:[%s1 + $0x8] sm:$0xff]
    %v33 = vld [vmem:[%s1 + $0x10] sm:$0xff]
    %v34 = vld [vmem:[%s1 + $0x18] sm:$0xff]
    %vm35 = vcmask 261120
    %v37 = vsel %vm35, %v29, 0
    %v40 = vsel %vm35, %v30, 0
    %42 = vmatprep.subr.mxu0 0.0
    %43 = vmatpush1.msra.mxu0 %v31
    %44 = vmatprep.subr.mxu0 0.0
    %45 = vmatpush1.msra.mxu0 %v32
    %46 = vmatprep.subr.mxu0 0.0
    %47 = vmatpush1.msra.mxu0 %v33
    %48 = vmatprep.subr.mxu0 0.0
    %49 = vmatpush1.msra.mxu0 %v34
    %50 = vmatprep.subr.mxu0 0.0
    %51 = vmatpush1.msra.mxu0 0.0
    %52 = vmatprep.subr.mxu0 0.0
    %53 = vmatpush1.msra.mxu0 0.0
    %54 = vmatprep.subr.mxu0 0.0
    %55 = vmatpush1.msra.mxu0 0.0
    %56 = vmatprep.subr.mxu0 0.0
    %57 = vmatpush1.msra.mxu0 0.0
    %58 = vmatprep.subr.mxu0 0.0
    %59 = vmatpush1.msra.mxu0 0.0
    %60 = vmatprep.subr.mxu0 0.0
    %61 = vmatpush1.msra.mxu0 0.0
    %62 = vmatprep.subr.mxu0 0.0
    %63 = vmatpush1.msra.mxu0 0.0
    %64 = vmatprep.subr.mxu0 0.0
    %65 = vmatpush1.msra.mxu0 0.0
    %66 = vmatprep.subr.mxu0 0.0
    %67 = vmatpush1.msra.mxu0 0.0
    %68 = vmatprep.subr.mxu0 0.0
    %69 = vmatpush1.msra.mxu0 0.0
    %70 = vmatprep.subr.mxu0 0.0
    %71 = vmatpush1.msra.mxu0 0.0
    %72 = vmatprep.subr.mxu0 0.0
    %73 = vmatpush1.msra.mxu0 0.0
    %74 = vmatprep.subr.mxu0 0.0
    %75 = vmatpush1.msra.mxu0 0.0
    %76 = vmatprep.subr.mxu0 0.0
    %77 = vmatpush1.msra.mxu0 0.0
    %78 = vmatprep.subr.mxu0 0.0
    %79 = vmatpush1.msra.mxu0 0.0
    %80 = vmatprep.subr.mxu0 0.0
    %81 = vmatpush1.msra.mxu0 0.0
    %82 = vmatprep.subr.mxu0 0.0
    %83 = vmatpush1.msra.mxu0 0.0
    %84 = vmatprep.subr.mxu0 0.0
    %85 = vmatpush1.msra.mxu0 0.0
    %86 = vmatprep.subr.mxu0 0.0
    %87 = vmatpush1.msra.mxu0 0.0
    %88 = vmatprep.subr.mxu0 0.0
    %89 = vmatpush1.msra.mxu0 0.0
    %90 = vmatprep.subr.mxu0 0.0
    %91 = vmatpush1.msra.mxu0 0.0
    %92 = vmatprep.subr.mxu0 0.0
    %93 = vmatpush1.msra.mxu0 0.0
    %94 = vmatprep.subr.mxu0 0.0
    %95 = vmatpush1.msra.mxu0 0.0
    %96 = vmatprep.subr.mxu0 0.0
    %97 = vmatpush1.msra.mxu0 0.0
    %98 = vmatprep.subr.mxu0 0.0
    %99 = vmatpush1.msra.mxu0 0.0
    %100 = vmatprep.subr.mxu0 0.0
    %101 = vmatpush1.msra.mxu0 0.0
    %102 = vmatprep.subr.mxu0 0.0
    %103 = vmatpush1.msra.mxu0 0.0
    %104 = vmatprep.subr.mxu0 0.0
    %105 = vmatpush1.msra.mxu0 0.0
    %106 = vmatprep.mubr.f32.mxu0 0.0
    %107 = vmatmul.mubr.f32.gmra.mrb[0].mxu0 %v37
    %v108 = vpop.f32.mrb[0].mxu0
    %v109 = vadd.f32 0.0, %v108
    %v110 = vpop.f32.mrb[0].mxu0
    %111 = vmatprep.mubr.f32.mxu0 0.0
    %112 = vmatmul.mubr.f32.gmra.mrb[0].mxu0 %v40
    %v113 = vpop.f32.mrb[0].mxu0
    %v114 = vadd.f32 0.0, %v113
    %v115 = vpop.f32.mrb[0].mxu0
    %116 = vdwg.mxu0
    %v117 = vld [vmem:[%s2] sm:$0x1]
    %v119 = vlaneseq
    %v120 = vshrl.u32 %v119, 7
    %v121 = vsub.s32 0, %v120
    %v122 = vrot.slane %v117, %v121
    %v124 = vmul.f32 %v109, %v122
    %v125 = vmul.f32 %v114, %v122
    %126 = vst [vmem:[#allocation5] sm:$0xff] %v124
    %127 = vst [vmem:[#allocation5 + $0x8] sm:$0xff] %v125
    // Predicated region
    $region18: #{norm_linear.3} parent=1 // pred_check
      _
    $region19: #{norm_linear.3} parent=1 // pred_check_branch
      %129 = sbr.rel (0) target = $region21
    $region20: #{norm_linear.3} parent=1 // pred_region
      %s131 = ssub.s32 256, 256
      %132 = vsyncadd [#allocation4], %s131
      %s133 = sshll.u32 [#allocation5], 4
      %s134 = int_to_ptr.vmem [resolvable:$true] %s133
      %139 = dma.vmem_to_hbm [thread:$0]  %s134, 256, %s3, [#allocation4], 128, 128, 8
    $region21: #{norm_linear.3} parent=1 // pred_fallthru
      _
    // Predicated region
    $region22: #{norm_linear.3} parent=1 // pred_check
      _
    $region23: #{norm_linear.3} parent=1 // pred_check_branch
      %141 = sbr.rel (0) target = $region25
    $region24: #{norm_linear.3} parent=1 // pred_region
      %142 = dma.done [#allocation4], 256
    $region25: #{norm_linear.3} parent=1 // pred_fallthru
      _
    %143 = vsyncpa [#allocation3], 1
    %144 = vsyncpa [#allocation4], 1

// kernel: norm_linear.2
$region0: #{norm_linear.2}
  #allocation0 [shape = 'u32[]', space=smem, size = 0x4, offset = 0x4, fixed_abs, tag = 'smem constant byte address 0x4 - core index']
  #allocation1 [shape = 'u32[144,128]{1,0:T(1,128)}', space=vmem, size = 0x12000, scoped, tag = 'internal scratch']
  %s0 = inlined_call_operand.hbm [shape: f32[32,128], index: 0, kind: input, shape index: {}]
  %s1 = inlined_call_operand.vmem [shape: f32[1,128], index: 1, kind: output, shape index: {}]
  %s2 = sld [smem:[#allocation0]]
  $region18: #{norm_linear.2} parent=0
    _
  %s4 = ssub.s32 1, %s2
  %s5 = scalar_select 0, %s4, %s2
  $region1: #{norm_linear.2} parent=0
    #allocation2 [shape = 'u8[16384]{0}', space=vmem, size = 0x4000, scoped, tag = 'input window, operand 0, single buffered']
    #allocation3 [shape = 's32[1]{0}', space=sflag, size = 0x4, scoped, tag = 'scoped memory for norm_linear.2']
    %6 = vsyncpa [#allocation3], 0
    // Predicated region
    $region2: #{norm_linear.2} parent=1 // pred_check
      _
    $region3: #{norm_linear.2} parent=1 // pred_check_branch
      %8 = sbr.rel (0) target = $region5
    $region4: #{norm_linear.2} parent=1 // pred_region
      %s10 = ssub.s32 512, 512
      %11 = vsyncadd [#allocation3], %s10
      %s12 = sshll.u32 [#allocation2], 4
      %s13 = int_to_ptr.vmem [resolvable:$true] %s12
      %18 = dma.hbm_to_vmem [thread:$0]  %s0, 512, %s13, [#allocation3], 128, 128, 8
    $region5: #{norm_linear.2} parent=1 // pred_fallthru
      _
    // Predicated region
    $region6: #{norm_linear.2} parent=1 // pred_check
      _
    $region7: #{norm_linear.2} parent=1 // pred_check_branch
      %20 = sbr.rel (0) target = $region9
    $region8: #{norm_linear.2} parent=1 // pred_region
      %21 = dma.done [#allocation3], 512
    $region9: #{norm_linear.2} parent=1 // pred_fallthru
      _
    %v22 = vld [vmem:[#allocation2] sm:$0xff]
    %v23 = vld [vmem:[#allocation2 + $0x8] sm:$0xff]
    %v24 = vld [vmem:[#allocation2 + $0x10] sm:$0xff]
    %v25 = vld [vmem:[#allocation2 + $0x18] sm:$0xff]
    %v26 = vmul.f32 %v22, %v22
    %v27 = vmul.f32 %v23, %v23
    %v28 = vmul.f32 %v24, %v24
    %v29 = vmul.f32 %v25, %v25
    %v30 = vadd.f32 %v26, %v27
    %v31 = vadd.f32 %v30, %v28
    %v32 = vadd.f32 %v31, %v29
    %v33 = vrot.slane %v32, 4
    %v34 = vadd.f32 %v32, %v33
    %v35 = vrot.slane %v34, 2
    %v36 = vadd.f32 %v34, %v35
    %v37 = vrot.slane %v36, 1
    %v38 = vadd.f32 %v36, %v37
    %v39 = vmax.f32 %v38, 1e-24
    %v40 = vrsqrt.pop %v39
    %41 = vst [vmem:[%s1] sm:$0x1] %v40
    // Predicated region
    $region10: #{norm_linear.2} parent=1 // pred_check
      _
    $region11: #{norm_linear.2} parent=1 // pred_check_branch
      %43 = sbr.rel (0) target = $region13
    $region12: #{norm_linear.2} parent=1 // pred_region
      _
    $region13: #{norm_linear.2} parent=1 // pred_fallthru
      _
    // Predicated region
    $region14: #{norm_linear.2} parent=1 // pred_check
      _
    $region15: #{norm_linear.2} parent=1 // pred_check_branch
      %45 = sbr.rel (0) target = $region17
    $region16: #{norm_linear.2} parent=1 // pred_region
      _
    $region17: #{norm_linear.2} parent=1 // pred_fallthru
      _
    %46 = vsyncpa [#allocation3], 1

</llo_original>
